<compile_context>
chip_gen: v6e
topology: v6e:2x2x1
jax: 0.10.0
libtpu: 0.0.40
codegen_flags: <defaults>
</compile_context>

<pallas_src>
import functools

import jax
import jax.numpy as jnp
from jax.experimental import pallas as pl
from jax.experimental.pallas import tpu as pltpu


def _med3(a, b, c):
    """Element-wise median of three arrays (4 min/max ops)."""
    return jnp.maximum(jnp.minimum(a, b), jnp.minimum(jnp.maximum(a, b), c))


def _select_lower_median(vals):
    """Lower median (sorted index (m-1)//2) of a list of same-shape arrays.

    Partial selection network: after pass j, vals[j] holds the j-th smallest
    element; only the first r+1 ranks are produced (cheaper than a full sort).
    """
    vals = list(vals)
    m = len(vals)
    r = (m - 1) // 2
    for j in range(r + 1):
        for i in range(j + 1, m):
            lo = jnp.minimum(vals[j], vals[i])
            hi = jnp.maximum(vals[j], vals[i])
            vals[j], vals[i] = lo, hi
    return vals[r]


def _median_pool_kernel(x_ref, o_ref, *, k: int, TH: int, W: int):
    # x_ref: (HP, Wp) reflect-padded plane (VMEM-resident across the strip axis)
    # o_ref: (TH, W)  one output row-strip
    h = pl.program_id(1)
    row0 = h * TH
    if TH % 8 == 0:
        row0 = pl.multiple_of(row0, 8)

    if k == 3:
        # Column-presort exact median-of-9: vertically sort the three rows once
        # (full halo width), then combine three lane-shifted views.
        a = x_ref[pl.ds(row0 + 0, TH), :]
        b = x_ref[pl.ds(row0 + 1, TH), :]
        c = x_ref[pl.ds(row0 + 2, TH), :]
        b, c = jnp.minimum(b, c), jnp.maximum(b, c)
        a, b = jnp.minimum(a, b), jnp.maximum(a, b)
        b, c = jnp.minimum(b, c), jnp.maximum(b, c)   # now a <= b <= c per column
        lo0, lo1, lo2 = (a[:, dx:dx + W] for dx in range(3))
        mi0, mi1, mi2 = (b[:, dx:dx + W] for dx in range(3))
        hi0, hi1, hi2 = (c[:, dx:dx + W] for dx in range(3))
        max_lo = jnp.maximum(jnp.maximum(lo0, lo1), lo2)
        med_mi = _med3(mi0, mi1, mi2)
        min_hi = jnp.minimum(jnp.minimum(hi0, hi1), hi2)
        o_ref[...] = _med3(max_lo, med_mi, min_hi)
    else:
        # General k: load the k*k window views directly from VMEM.
        vals = [x_ref[pl.ds(row0 + dy, TH), dx:dx + W]
                for dy in range(k) for dx in range(k)]
        o_ref[...] = _select_lower_median(vals)


def blur(x: jax.Array, k: int | None = None) -> jax.Array:
    """Pallas equivalent of Blur(k).forward(x) for NCHW input x."""
    k = k or 3
    N, C, H, W = x.shape
    if min(H, W) <= k // 2:
        raise ValueError(
            f"reflect padding needs spatial dims > {k // 2} for kernel size {k}")

    pad = k - 1
    pad_t, pad_b = pad // 2, pad - pad // 2
    pad_l, pad_r = pad // 2, pad - pad // 2
    Wp = W + pad

    # Strip height: keep the live (TH, Wp) arrays of the median network inside
    # the 64 x 4 KiB vreg file; budget f32 compute even for bf16 storage
    # (v5e widens the min/max network to f32).
    lane_tiles = (Wp + 127) // 128
    live = 8 if k == 3 else (k * k + 2)
    TH = max(8, (320 // (live * lane_tiles)) & ~7)
    TH = min(TH, H)
    nH = -(-H // TH)

    xp = jnp.pad(x, ((0, 0), (0, 0), (pad_t, pad_b), (pad_l, pad_r)),
                 mode="reflect")
    extra = nH * TH - H          # keep the last strip's in-kernel reads in bounds
    if extra > 0:
        xp = jnp.pad(xp, ((0, 0), (0, 0), (0, extra), (0, 0)))
    HP = H + pad + extra
    NC = N * C
    xp = xp.reshape(NC, HP, Wp)

    itemsize = jnp.dtype(x.dtype).itemsize
    vmem_need = 2 * (HP * Wp + TH * W) * itemsize + (2 << 20)
    vmem_limit = int(min(100 << 20, max(vmem_need, 32 << 20)))

    kernel = functools.partial(_median_pool_kernel, k=k, TH=TH, W=W)

    out = pl.pallas_call(
        kernel,
        out_shape=jax.ShapeDtypeStruct((NC, H, W), x.dtype),
        grid=(NC, nH),
        in_specs=[pl.BlockSpec((None, HP, Wp), lambda b, h: (b, 0, 0))],
        out_specs=pl.BlockSpec((None, TH, W), lambda b, h: (b, h, 0)),
        compiler_params=pltpu.CompilerParams(
            dimension_semantics=("parallel", "parallel"),
            vmem_limit_bytes=vmem_limit),
    )(xp)

    # (NC, H, W) -> (N, C, H, W): metadata-only reshape, no extra HBM pass.
    return out.reshape(N, C, H, W)


def _reference_blur(x: jax.Array, k: int = 3) -> jax.Array:
    """Pure-JAX reference (matches torch lower-median semantics)."""
    N, C, H, W = x.shape
    pad = k - 1
    xp = jnp.pad(x, ((0, 0), (0, 0), (pad // 2, pad - pad // 2),
                     (pad // 2, pad - pad // 2)), mode="reflect")
    windows = jnp.stack(
        [xp[:, :, dy:dy + H, dx:dx + W] for dy in range(k) for dx in range(k)],
        axis=-1,
    )
    return jnp.sort(windows, axis=-1)[..., (k * k - 1) // 2]


if __name__ == "__main__":
    key = jax.random.PRNGKey(0)
    x = jax.random.normal(key, (2, 4, 16, 16), dtype=jnp.float32)

    # Default k=3 (column-presort exact median-of-9 path).
    y = jax.block_until_ready(blur(x, k=3))
    assert y.shape == x.shape and y.dtype == x.dtype
    assert jnp.allclose(y, _reference_blur(x, k=3), atol=1e-6), \
        "k=3 median pool mismatch vs reference"

    # General (partial selection network) path.
    y5 = jax.block_until_ready(blur(x, k=5))
    assert jnp.allclose(y5, _reference_blur(x, k=5), atol=1e-6), \
        "k=5 median pool mismatch vs reference"

    # Exercise the H % TH != 0 path (partial last strip, clipped output block).
    x2 = jax.random.normal(jax.random.PRNGKey(0), (1, 2, 20, 16), jnp.float32)
    y2 = jax.block_until_ready(blur(x2, k=5))
    assert jnp.allclose(y2, _reference_blur(x2, k=5), atol=1e-6), \
        "non-divisible-H median pool mismatch vs reference"

    print("KERNEL_OK")
</pallas_src>

<mosaic_0001>
module attributes {stable_mosaic.version = 11 : i64} {
  func.func @_median_pool_kernel(%arg0: i32, %arg1: i32, %arg2: memref<1x18x18xf32, #tpu.memory_space<vmem>>, %arg3: memref<1x16x16xf32, #tpu.memory_space<vmem>>) attributes {dimension_semantics = [#tpu.dimension_semantics<parallel>, #tpu.dimension_semantics<parallel>], iteration_bounds = array<i64: 8, 1>, scalar_prefetch = 0 : i64, scratch_operands = 0 : i64, tpu.core_type = #tpu.core_type<tc>, window_params = [{transform_indices = @transform_0, window_bounds = array<i64: 1, 18, 18>}, {transform_indices = @transform_1, window_bounds = array<i64: 1, 16, 16>}]} {
    %c16_i32 = arith.constant 16 : i32
    %0 = arith.muli %arg1, %c16_i32 : i32
    %1 = tpu.assume_multiple %0, 8 : i32
    %c0_i32 = arith.constant 0 : i32
    %2 = arith.addi %1, %c0_i32 : i32
    %c0 = arith.constant 0 : index
    %3 = arith.index_cast %2 : i32 to index
    %c0_0 = arith.constant 0 : index
    %4 = vector.load %arg2[%c0, %3, %c0_0] : memref<1x18x18xf32, #tpu.memory_space<vmem>>, vector<1x16x18xf32>
    %5 = vector.shape_cast %4 : vector<1x16x18xf32> to vector<16x18xf32>
    %c1_i32 = arith.constant 1 : i32
    %6 = arith.addi %1, %c1_i32 : i32
    %c0_1 = arith.constant 0 : index
    %7 = arith.index_cast %6 : i32 to index
    %c0_2 = arith.constant 0 : index
    %8 = vector.load %arg2[%c0_1, %7, %c0_2] : memref<1x18x18xf32, #tpu.memory_space<vmem>>, vector<1x16x18xf32>
    %9 = vector.shape_cast %8 : vector<1x16x18xf32> to vector<16x18xf32>
    %c2_i32 = arith.constant 2 : i32
    %10 = arith.addi %1, %c2_i32 : i32
    %c0_3 = arith.constant 0 : index
    %11 = arith.index_cast %10 : i32 to index
    %c0_4 = arith.constant 0 : index
    %12 = vector.load %arg2[%c0_3, %11, %c0_4] : memref<1x18x18xf32, #tpu.memory_space<vmem>>, vector<1x16x18xf32>
    %13 = vector.shape_cast %12 : vector<1x16x18xf32> to vector<16x18xf32>
    %14 = arith.minimumf %9, %13 : vector<16x18xf32>
    %15 = arith.maximumf %9, %13 : vector<16x18xf32>
    %16 = arith.minimumf %5, %14 : vector<16x18xf32>
    %17 = arith.maximumf %5, %14 : vector<16x18xf32>
    %18 = arith.minimumf %17, %15 : vector<16x18xf32>
    %19 = arith.maximumf %17, %15 : vector<16x18xf32>
    %20 = vector.extract_strided_slice %16 {offsets = [0, 0], sizes = [16, 16], strides = [1, 1]} : vector<16x18xf32> to vector<16x16xf32>
    %21 = vector.extract_strided_slice %16 {offsets = [0, 1], sizes = [16, 16], strides = [1, 1]} : vector<16x18xf32> to vector<16x16xf32>
    %22 = vector.extract_strided_slice %16 {offsets = [0, 2], sizes = [16, 16], strides = [1, 1]} : vector<16x18xf32> to vector<16x16xf32>
    %23 = vector.extract_strided_slice %18 {offsets = [0, 0], sizes = [16, 16], strides = [1, 1]} : vector<16x18xf32> to vector<16x16xf32>
    %24 = vector.extract_strided_slice %18 {offsets = [0, 1], sizes = [16, 16], strides = [1, 1]} : vector<16x18xf32> to vector<16x16xf32>
    %25 = vector.extract_strided_slice %18 {offsets = [0, 2], sizes = [16, 16], strides = [1, 1]} : vector<16x18xf32> to vector<16x16xf32>
    %26 = vector.extract_strided_slice %19 {offsets = [0, 0], sizes = [16, 16], strides = [1, 1]} : vector<16x18xf32> to vector<16x16xf32>
    %27 = vector.extract_strided_slice %19 {offsets = [0, 1], sizes = [16, 16], strides = [1, 1]} : vector<16x18xf32> to vector<16x16xf32>
    %28 = vector.extract_strided_slice %19 {offsets = [0, 2], sizes = [16, 16], strides = [1, 1]} : vector<16x18xf32> to vector<16x16xf32>
    %29 = arith.maximumf %20, %21 : vector<16x16xf32>
    %30 = arith.maximumf %29, %22 : vector<16x16xf32>
    %31 = arith.minimumf %23, %24 : vector<16x16xf32>
    %32 = arith.maximumf %23, %24 : vector<16x16xf32>
    %33 = arith.minimumf %32, %25 : vector<16x16xf32>
    %34 = arith.maximumf %31, %33 : vector<16x16xf32>
    %35 = arith.minimumf %26, %27 : vector<16x16xf32>
    %36 = arith.minimumf %35, %28 : vector<16x16xf32>
    %37 = arith.minimumf %30, %34 : vector<16x16xf32>
    %38 = arith.maximumf %30, %34 : vector<16x16xf32>
    %39 = arith.minimumf %38, %36 : vector<16x16xf32>
    %40 = arith.maximumf %37, %39 : vector<16x16xf32>
    %c0_5 = arith.constant 0 : index
    %c0_6 = arith.constant 0 : index
    %c0_7 = arith.constant 0 : index
    %41 = vector.load %arg3[%c0_5, %c0_6, %c0_7] : memref<1x16x16xf32, #tpu.memory_space<vmem>>, vector<1x16x16xf32>
    %42 = vector.shape_cast %41 : vector<1x16x16xf32> to vector<16x16xf32>
    %43 = vector.shape_cast %40 : vector<16x16xf32> to vector<1x16x16xf32>
    tpu.vector_store %arg3[%c0_5, %c0_6, %c0_7], %43 {strides = array<i32>} : memref<1x16x16xf32, #tpu.memory_space<vmem>>, vector<1x16x16xf32>,
    return
  }
  func.func @transform_0(%arg0: i32, %arg1: i32) -> (i32, i32, i32) {
    %c0_i32 = arith.constant 0 : i32
    %c0_i32_0 = arith.constant 0 : i32
    %c0_i32_1 = arith.constant 0 : i32
    return %arg0, %c0_i32, %c0_i32_0 : i32, i32, i32
  }
  func.func @transform_1(%arg0: i32, %arg1: i32) -> (i32, i32, i32) {
    %c0_i32 = arith.constant 0 : i32
    %c0_i32_0 = arith.constant 0 : i32
    return %arg0, %arg1, %c0_i32 : i32, i32, i32
  }
}

</mosaic_0001>

<llo_original>
// kernel: tpu_custom_call.1
$region0: #{tpu_custom_call.1}
  #allocation0 [shape = 'u32[]', space=smem, size = 0x4, offset = 0x4, fixed_abs, tag = 'smem constant byte address 0x4 - core index']
  #allocation1 [shape = 'u32[144,128]{1,0:T(1,128)}', space=vmem, size = 0x12000, scoped, tag = 'internal scratch']
  %s0 = inlined_call_operand.vmem [shape: f32[8,18,18], index: 0, kind: input, shape index: {}]
  %s1 = inlined_call_operand.hbm [shape: f32[8,16,16], index: 1, kind: output, shape index: {}]
  %s2 = sld [smem:[#allocation0]]
  $region37: #{tpu_custom_call.1} parent=0
    _
  %s4 = ssub.s32 1, %s2
  %s5 = scalar_select 0, %s4, %s2
  $region1: #{tpu_custom_call.1} parent=0
    #allocation2 [shape = 'u8[16384]{0}', space=vmem, size = 0x4000, scoped, tag = 'output window, operand 0']
    #allocation3 [shape = 's32[2]{0}', space=sflag, size = 0x8, scoped, tag = 'scoped memory for tpu_custom_call.1']
    %6 = vsyncpa [#allocation3], 0
    %s7 = scalar_lea.sflag [#allocation3], 1
    %8 = vsyncpa %s7, 0
    loop: start=0, step=1, limit=10
    $region2: #{tpu_custom_call.1} parent=1 // loop_pre_header
      _
    $region3: #{tpu_custom_call.1} parent=1 // loop_header
      %s10 = sphi 0, %s14
      %p11 = scmp.ge.s32.totalorder %s10, 10
      %s17 = sphi 0, %s29
      %s18 = sphi 0, %s25
      %s19 = sphi 0, %s17
      %s20 = sphi 0, %s18
      %s21 = sphi 0, %s19
      %s22 = sphi 0, %s20
      %s32 = sphi 0, %s34
      %s35 = sphi 0, %s32
      %s36 = sphi 0, %s35
      %s52 = sphi 0, %s36
      %s60 = sphi 0, %s62
      %s63 = sphi 0, %s60
      %s64 = sphi 0, %s63
      %s80 = sphi 0, %s64
    $region4: #{tpu_custom_call.1} parent=1 // loop_header_branch
      %13 = sbr.rel (%p11) target = $region8
    $region5: #{tpu_custom_call.1} parent=1 // loop_body
      %s15 = ssub.s32 %s10, 1
      %s16 = ssub.s32 %s10, 2
      %s23 = sadd.s32 1, %s18
      %p24 = scmp.ge.s32.totalorder %s23, 1
      %s25 = scalar_select %p24, 0, %s23
      %s26 = sadd.s32 1, %s17
      %s27 = scalar_select %p24, %s26, %s17
      %p28 = scmp.ge.s32.totalorder %s27, 8
      %s29 = scalar_select %p28, 0, %s27
      %s30 = ssub.s32 %s17, %s29
      %p31 = scmp.eq.s32.totalorder %s30, 0
      %s33 = sadd.s32 %s32, 1
      %s34 = scalar_select %p31, %s32, %s33
      %p37 = pneg %p31
      %p38 = scmp.eq.s32.totalorder %s10, 7
      %p39 = por %p37, %p38
      %p40 = scmp.ne.s32.totalorder %s32, %s35
      %p41 = scmp.eq.s32.totalorder %s10, 0
      %p42 = por %p40, %p41
      %p43 = scmp.ne.s32.totalorder %s32, %s35
      %p44 = scmp.eq.s32.totalorder %s15, 7
      %p45 = por %p43, %p44
      %p46 = scmp.ne.s32.totalorder %s35, %s36
      %p47 = scmp.eq.s32.totalorder %s15, 0
      %p48 = por %p46, %p47
      %p49 = scmp.ne.s32.totalorder %s35, %s36
      %p50 = scmp.eq.s32.totalorder %s16, 7
      %p51 = por %p49, %p50
      %p53 = scmp.ne.s32.totalorder %s36, %s52
      %p54 = scmp.eq.s32.totalorder %s16, 0
      %p55 = por %p53, %p54
      %s56 = ssub.s32 %s17, %s29
      %s57 = ssub.s32 %s18, %s25
      %s58 = sor.u32 %s56, %s57
      %p59 = scmp.eq.s32.totalorder %s58, 0
      %s61 = sadd.s32 %s60, 1
      %s62 = scalar_select %p59, %s60, %s61
      %p65 = pneg %p59
      %p66 = scmp.eq.s32.totalorder %s10, 7
      %p67 = por %p65, %p66
      %p68 = scmp.ne.s32.totalorder %s60, %s63
      %p69 = scmp.eq.s32.totalorder %s10, 0
      %p70 = por %p68, %p69
      %p71 = scmp.ne.s32.totalorder %s60, %s63
      %p72 = scmp.eq.s32.totalorder %s15, 7
      %p73 = por %p71, %p72
      %p74 = scmp.ne.s32.totalorder %s63, %s64
      %p75 = scmp.eq.s32.totalorder %s15, 0
      %p76 = por %p74, %p75
      %p77 = scmp.ne.s32.totalorder %s63, %s64
      %p78 = scmp.eq.s32.totalorder %s16, 7
      %p79 = por %p77, %p78
      %p81 = scmp.ne.s32.totalorder %s64, %s80
      %p82 = scmp.eq.s32.totalorder %s16, 0
      %p83 = por %p81, %p82
      %p84 = scmp.le.s32.totalorder 1, %s10
      %p85 = scmp.lt.s32.totalorder %s10, 9
      %p86 = pnand %p84, %p85
      %p87 = pneg %p86
      // Predicated region
      $region9: #{tpu_custom_call.1} parent=5 // pred_check
        _
      $region10: #{tpu_custom_call.1} parent=5 // pred_check_branch
        %89 = sbr.rel (%p86) target = $region12
      $region11: #{tpu_custom_call.1} parent=5 // pred_region
        %s90 = ssub.s32 %s10, 1
      $region12: #{tpu_custom_call.1} parent=5 // pred_fallthru
        _
      %p91 = scmp.lt.s32.totalorder %s10, 8
      // Predicated region
      $region13: #{tpu_custom_call.1} parent=5 // pred_check
        %p92 = pneg %p91
      $region14: #{tpu_custom_call.1} parent=5 // pred_check_branch
        %94 = sbr.rel (%p92) target = $region16
      $region15: #{tpu_custom_call.1} parent=5 // pred_region
        // Predicated region
        $region17: #{tpu_custom_call.1} parent=15 // pred_check
          %p95 = pneg %p42
        $region18: #{tpu_custom_call.1} parent=15 // pred_check_branch
          %97 = sbr.rel (%p95) target = $region20
        $region19: #{tpu_custom_call.1} parent=15 // pred_region
          %p98 = scmp.lt.s32.totalorder %s17, 7
          %s99 = scalar_select %p98, %s17, 7
          %s100 = smul.addr %s99, 3
          %s101 = smul.addr %s100, 8
          %s102 = scalar_lea.vmem %s0, %s101
        $region20: #{tpu_custom_call.1} parent=15 // pred_fallthru
          _
      $region16: #{tpu_custom_call.1} parent=5 // pred_fallthru
        _
      %p103 = scmp.le.s32.totalorder 1, %s10
      %p104 = scmp.lt.s32.totalorder %s10, 9
      %p105 = pnand %p103, %p104
      %p106 = pneg %p105
      // Predicated region
      $region21: #{tpu_custom_call.1} parent=5 // pred_check
        _
      $region22: #{tpu_custom_call.1} parent=5 // pred_check_branch
        %108 = sbr.rel (%p105) target = $region24
      $region23: #{tpu_custom_call.1} parent=5 // pred_region
        %s109 = ssub.s32 %s10, 1
        %p110 = scmp.lt.s32.totalorder %s19, 7
        %s111 = scalar_select %p110, %s19, 7
        %s112 = smul.addr %s111, 3
        %s113 = smul.addr %s112, 8
        %s114 = scalar_lea.vmem %s0, %s113
        %p115 = pneg %p48
        %p116 = pneg %p45
        %p117 = pneg %p76
        %p118 = pneg %p73
        %s119 = sand.u32 %s63, 1
        %s120 = scalar_lea.sflag [#allocation3], %s119
        %s121 = sand.u32 %s63, 1
        %s122 = smul.addr %s121, 16
        %s123 = scalar_lea.vmem [#allocation2], %s122
        %p124 = scmp.lt.s32.totalorder %s19, 7
        %s125 = scalar_select %p124, %s19, 7
        %s126 = smul.addr %s125, 3
        %s127 = smul.addr %s126, 8
        %s128 = scalar_lea.vmem %s0, %s127
        %s129 = smul.u32 2, %s20
        %s130 = smul.u32 %s20, 16
        %s131 = scalar_lea.vmem %s128, %s130
        %v132 = vld [vmem:[%s131] sm:$0xff]
        %v133 = vld [vmem:[%s131 + $0x8] sm:$0xff]
        %s134 = sadd.s32 %s130, 1
        %s135 = scalar_lea.vmem %s128, %s134
        %v136 = vld [vmem:[%s135] sm:$0xff]
        %v137 = vld [vmem:[%s135 + $0x8] sm:$0xff]
        %s138 = sadd.s32 %s130, 2
        %s139 = scalar_lea.vmem %s128, %s138
        %v140 = vld [vmem:[%s139] sm:$0xff]
        %v141 = vld [vmem:[%s139 + $0x8] sm:$0xff]
        %v142 = vmin.f32 %v136, %v140
        %v143 = vmin.f32 %v137, %v141
        %v144 = vmax.f32 %v136, %v140
        %v145 = vmax.f32 %v137, %v141
        %v146 = vmin.f32 %v132, %v142
        %v147 = vmin.f32 %v133, %v143
        %v148 = vmax.f32 %v132, %v142
        %v149 = vmax.f32 %v133, %v143
        %v150 = vmin.f32 %v148, %v144
        %v151 = vmin.f32 %v149, %v145
        %v152 = vmax.f32 %v148, %v144
        %v153 = vmax.f32 %v149, %v145
        %156 = vrot.lane.b32.xlu0 %v146, 127
        %v157 = vpop.permute.xlu0 %156
        %158 = vrot.lane.b32.xlu0 %v147, 127
        %v159 = vpop.permute.xlu0 %158
        %v162 = vmax.f32 %v146, %v157
        %v163 = vmax.f32 %v147, %v159
        %164 = vrot.lane.b32.xlu0 %v146, 126
        %v165 = vpop.permute.xlu0 %164
        %166 = vrot.lane.b32.xlu0 %v147, 126
        %v167 = vpop.permute.xlu0 %166
        %v170 = vmax.f32 %v162, %v165
        %v171 = vmax.f32 %v163, %v167
        %174 = vrot.lane.b32.xlu0 %v150, 127
        %v175 = vpop.permute.xlu0 %174
        %176 = vrot.lane.b32.xlu0 %v151, 127
        %v177 = vpop.permute.xlu0 %176
        %v180 = vmin.f32 %v150, %v175
        %v181 = vmin.f32 %v151, %v177
        %v182 = vmax.f32 %v150, %v175
        %v183 = vmax.f32 %v151, %v177
        %184 = vrot.lane.b32.xlu0 %v150, 126
        %v185 = vpop.permute.xlu0 %184
        %186 = vrot.lane.b32.xlu0 %v151, 126
        %v187 = vpop.permute.xlu0 %186
        %v190 = vmin.f32 %v182, %v185
        %v191 = vmin.f32 %v183, %v187
        %v192 = vmax.f32 %v180, %v190
        %v193 = vmax.f32 %v181, %v191
        %196 = vrot.lane.b32.xlu0 %v152, 127
        %v197 = vpop.permute.xlu0 %196
        %198 = vrot.lane.b32.xlu0 %v153, 127
        %v199 = vpop.permute.xlu0 %198
        %v202 = vmin.f32 %v152, %v197
        %v203 = vmin.f32 %v153, %v199
        %204 = vrot.lane.b32.xlu0 %v152, 126
        %v205 = vpop.permute.xlu0 %204
        %206 = vrot.lane.b32.xlu0 %v153, 126
        %v207 = vpop.permute.xlu0 %206
        %v210 = vmin.f32 %v202, %v205
        %v211 = vmin.f32 %v203, %v207
        %v212 = vmin.f32 %v170, %v192
        %v213 = vmin.f32 %v171, %v193
        %v214 = vmax.f32 %v170, %v192
        %v215 = vmax.f32 %v171, %v193
        %v216 = vmin.f32 %v214, %v210
        %v217 = vmin.f32 %v215, %v211
        %v218 = vmax.f32 %v212, %v216
        %v219 = vmax.f32 %v213, %v217
        %vm220 = vcmask 130048
        %221 = vst.msk [vmem:[%s123] sm:$0xff] %vm220, %v218
        %222 = vst.msk [vmem:[%s123 + $0x8] sm:$0xff] %vm220, %v219
        %s223 = sand.u32 %s63, 1
        %s224 = scalar_lea.sflag [#allocation3], %s223
        %s225 = sand.u32 %s63, 1
        %s226 = smul.addr %s225, 16
        %s227 = scalar_lea.vmem [#allocation2], %s226
        // Predicated region
        $region25: #{tpu_custom_call.1} parent=23 // pred_check
          %p228 = pneg %p73
        $region26: #{tpu_custom_call.1} parent=23 // pred_check_branch
          %230 = sbr.rel (%p228) target = $region28
        $region27: #{tpu_custom_call.1} parent=23 // pred_region
          %s231 = smul.u32 2, %s20
          %s233 = ssub.s32 256, 256
          %234 = vsyncadd %s224, %s233
          %s235 = smul.addr %s19, 2
          %s236 = sadd.s32 %s231, %s235
          %s237 = smul.addr %s236, 128
          %s238 = scalar_lea.hbm %s1, %s237
          %s239 = sshll.u32 %s227, 4
          %s240 = int_to_ptr.vmem [resolvable:$true] %s239
          %245 = dma.vmem_to_hbm [thread:$0]  %s240, 256, %s238, %s224, 128, 128, 8
        $region28: #{tpu_custom_call.1} parent=23 // pred_fallthru
          _
      $region24: #{tpu_custom_call.1} parent=5 // pred_fallthru
        _
      %p246 = scmp.le.s32.totalorder 2, %s10
      // Predicated region
      $region29: #{tpu_custom_call.1} parent=5 // pred_check
        %p247 = pneg %p246
      $region30: #{tpu_custom_call.1} parent=5 // pred_check_branch
        %249 = sbr.rel (%p247) target = $region32
      $region31: #{tpu_custom_call.1} parent=5 // pred_region
        %s250 = ssub.s32 %s10, 2
        // Predicated region
        $region33: #{tpu_custom_call.1} parent=31 // pred_check
          %p251 = pneg %p79
        $region34: #{tpu_custom_call.1} parent=31 // pred_check_branch
          %253 = sbr.rel (%p251) target = $region36
        $region35: #{tpu_custom_call.1} parent=31 // pred_region
          %s254 = sand.u32 %s64, 1
          %s255 = scalar_lea.sflag [#allocation3], %s254
          %s256 = sand.u32 %s64, 1
          %s257 = smul.addr %s256, 16
          %s258 = scalar_lea.vmem [#allocation2], %s257
          %259 = dma.done %s255, 256
        $region36: #{tpu_custom_call.1} parent=31 // pred_fallthru
          _
      $region32: #{tpu_custom_call.1} parent=5 // pred_fallthru
        _
    $region6: #{tpu_custom_call.1} parent=1 // loop_footer
      %s14 = sadd.s32 1, %s10
    $region7: #{tpu_custom_call.1} parent=1 // loop_footer_branch
      %9 = sbr.rel target = $region3
    $region8: #{tpu_custom_call.1} parent=1 // loop_exit
      _
    %260 = vsyncpa [#allocation3], 1
    %s261 = scalar_lea.sflag [#allocation3], 1
    %262 = vsyncpa %s261, 1

</llo_original>
